<compile_context>
chip_gen: v7x
topology: tpu7x:2x2x1
jax: 0.10.0
libtpu: 0.0.40
codegen_flags: <defaults>
</compile_context>

<pallas_src>
import functools

import jax
import jax.numpy as jnp
import numpy as np
from jax.experimental import pallas as pl
from jax.experimental.pallas import tpu as pltpu


def _cdiv(a, b):
    return -(-a // b)


def _round_up(a, b):
    return _cdiv(a, b) * b


def _dice_kernel(logits_ref, labels_ref, out_ref, acc_ref, *, C):
    """Grid = (batch, split, row_tile); row_tile is the reduction axis."""
    r = pl.program_id(2)
    nr = pl.num_programs(2)

    @pl.when(r == 0)
    def _():
        acc_ref[...] = jnp.zeros_like(acc_ref)

    # Running argmax over the C channel slabs (first-occurrence tie-break,
    # matching torch.argmax).  Native-dtype compares (bf16 stays bf16 on
    # v6e/v7x).  NaN logits: `>` never selects a NaN channel, whereas
    # torch.argmax treats NaN as maximal (edge case only).
    best = logits_ref[0]                                   # (TR, 128)
    pred = jnp.zeros(best.shape, jnp.int32)
    for c in range(1, C):
        row = logits_ref[c]
        better = row > best
        best = jnp.where(better, row, best)
        pred = jnp.where(better, jnp.int32(c), pred)

    labels = labels_ref[...].astype(jnp.int32)             # (TR, 128)

    # Pure-VPU accumulation; padded voxels carry label == C so they never hit.
    acc_ref[...] += (pred == labels).astype(jnp.int32)

    @pl.when(r == nr - 1)
    def _():
        inter = jnp.sum(acc_ref[...])                      # one XLU reduce / (b, s)
        out_ref[...] = jnp.full(out_ref.shape, inter, out_ref.dtype)


def dice_metric_v2(logits, labels, smooth=1e-12, *,
                   num_splits=None, tile_byte_budget=2 * 1024 * 1024):
    """Dice metric matching DiceMetric_v2.forward.

    logits: (B, C, *spatial) float (f32/bf16...); labels: (B, *spatial) int.
    Labels must lie in [0, C) — same requirement as torch.eye(C)[labels].
    """
    B, C = int(logits.shape[0]), int(logits.shape[1])
    V = int(np.prod(logits.shape[2:]))

    lg = logits.reshape(B, C, V)                 # native dtype, no extra pass
    lb = labels.reshape(B, V)
    if not jnp.issubdtype(lb.dtype, jnp.integer):
        # TODO(synk): float labels need one cast pass (torch does .type(LongTensor)).
        lb = lb.astype(jnp.int32)

    # --- Grid geometry ------------------------------------------------------
    LANE = 128
    NR = _cdiv(V, LANE)                          # voxel rows of 128 lanes

    # Optional voxel split -> second "parallel" grid axis (lets both v7x
    # TensorCores stream HBM when B == 1; near-free on single-TC chips).
    S = int(num_splits) if num_splits is not None else (2 if B == 1 else 1)
    S = max(1, S)

    # Row tile: ~tile_byte_budget streamed bytes per step, multiple of 32 rows
    # so int8 labels / bf16 logits keep native packed tiles.
    bytes_per_row = LANE * (C * lg.dtype.itemsize + lb.dtype.itemsize)
    tr = (tile_byte_budget // bytes_per_row) // 32 * 32
    tr = max(32, min(tr, 2048))
    rows_per_split = _cdiv(NR, S)
    tr = min(tr, _round_up(rows_per_split, 32))
    nrt = _cdiv(rows_per_split, tr)              # row tiles per split

    # --- Pad + reshape to the sublane-dense layout ---------------------------
    # Logits only need V to be a multiple of 128 (and at least one full row
    # tile); for typical volumes (V % 128 == 0, V large) this is a no-copy
    # metadata reshape.
    nr_lg = max(NR, tr)
    v_lg = nr_lg * LANE
    if v_lg != V:
        lg = jnp.pad(lg, ((0, 0), (0, 0), (0, v_lg - V)))
    lg = lg.reshape(B, C, nr_lg, LANE)

    # Labels are padded to the full grid extent with value C, so garbage
    # predictions in ragged / clamped blocks can never match.
    total_rows = S * nrt * tr
    pad_lb = total_rows * LANE - V
    if pad_lb:
        lb = jnp.pad(lb, ((0, 0), (0, pad_lb)), constant_values=C)
    lb = lb.reshape(B, total_rows, LANE)

    last_blk = _cdiv(nr_lg, tr) - 1              # last valid logits row block
    need_clamp = (S * nrt - 1) > last_blk        # Python-static; usually False

    def logits_imap(b, s, r):
        blk = s * nrt + r
        if need_clamp:
            blk = jnp.minimum(blk, last_blk)     # OOB blocks re-read a valid
        return (b, 0, blk, 0)                    # block; labels there are C.

    def labels_imap(b, s, r):
        return (b, s * nrt + r, 0)

    def out_imap(b, s, r):
        return (b, s, 0, 0)

    lg_blk_bytes = C * tr * LANE * lg.dtype.itemsize
    lb_blk_bytes = tr * LANE * lb.dtype.itemsize
    acc_bytes = tr * LANE * 4
    vmem_limit = min(32 * 1024 * 1024,
                     max(4 * 1024 * 1024,
                         2 * (lg_blk_bytes + lb_blk_bytes) + acc_bytes
                         + 2 * 1024 * 1024))

    kernel = functools.partial(_dice_kernel, C=C)

    counts = pl.pallas_call(
        kernel,
        out_shape=jax.ShapeDtypeStruct((B, S, 8, LANE), jnp.int32),
        grid_spec=pltpu.PrefetchScalarGridSpec(
            num_scalar_prefetch=0,
            grid=(B, S, nrt),
            in_specs=[
                pl.BlockSpec((None, C, tr, LANE), logits_imap),
                pl.BlockSpec((None, tr, LANE), labels_imap),
            ],
            out_specs=pl.BlockSpec((None, None, 8, LANE), out_imap),
            scratch_shapes=[pltpu.VMEM((tr, LANE), jnp.int32)],
        ),
        compiler_params=pltpu.CompilerParams(
            dimension_semantics=("parallel", "parallel", "arbitrary"),
            vmem_limit_bytes=vmem_limit,
        ),
    )(lg, lb)

    # Exact int32 intersection per sample; constant denominator 2*V + smooth
    # (each one-hot sums to exactly V when labels are in [0, C)).
    inter = counts[:, :, 0, 0].sum(axis=1)                    # (B,)
    denom = 2.0 * V + smooth
    score = 2.0 * inter.astype(jnp.float32) / jnp.float32(denom)
    return jnp.mean(score)


def _reference(logits, labels, smooth=1e-12):
    """Pure-JAX reproduction of the PyTorch forward for verification."""
    C = logits.shape[1]
    pred = jnp.argmax(logits, axis=1)
    m1 = jax.nn.one_hot(pred, C, dtype=jnp.float32)
    m2 = jax.nn.one_hot(labels.astype(jnp.int32), C, dtype=jnp.float32)
    B = logits.shape[0]
    m1f = m1.reshape(B, -1)
    m2f = m2.reshape(B, -1)
    inter = jnp.sum(m1f * m2f, axis=1)
    score = 2.0 * inter / (jnp.sum(m1f, axis=1) + jnp.sum(m2f, axis=1) + smooth)
    return jnp.mean(score)


if __name__ == "__main__":
    key = jax.random.PRNGKey(0)
    k1, k2, k3, k4, k5, k6 = jax.random.split(key, 6)

    # Test 1: primary shape from the module docstring (B x C x D x H x W).
    B, C, D, H, W = 2, 4, 4, 8, 16
    logits = jax.random.normal(k1, (B, C, D, H, W), dtype=jnp.float32)
    labels = jax.random.randint(k2, (B, D, H, W), 0, C, dtype=jnp.int32)
    dice = jax.block_until_ready(dice_metric_v2(logits, labels))
    ref = jax.block_until_ready(_reference(logits, labels))
    assert np.allclose(np.asarray(dice), np.asarray(ref),
                       rtol=1e-5, atol=1e-6), (dice, ref)

    # Test 2: V not a multiple of 128, small tile budget -> multiple row tiles,
    # ragged logits edge block, label padding with value C.
    B2, C2, D2, H2, W2 = 2, 3, 5, 9, 160          # V = 7200
    logits2 = jax.random.normal(k3, (B2, C2, D2, H2, W2), dtype=jnp.float32)
    labels2 = jax.random.randint(k4, (B2, D2, H2, W2), 0, C2, dtype=jnp.int32)
    dice2 = jax.block_until_ready(
        dice_metric_v2(logits2, labels2, tile_byte_budget=64 * 1024))
    ref2 = jax.block_until_ready(_reference(logits2, labels2))
    assert np.allclose(np.asarray(dice2), np.asarray(ref2),
                       rtol=1e-5, atol=1e-6), (dice2, ref2)

    # Test 3: B=1 (auto voxel split across 2 parallel grid slots, clamped
    # index_map), bf16 logits compared natively, int8 labels streamed natively.
    B3, C3, D3, H3, W3 = 1, 4, 4, 8, 24           # V = 768
    logits3 = jax.random.normal(k5, (B3, C3, D3, H3, W3), dtype=jnp.bfloat16)
    labels3 = jax.random.randint(k6, (B3, D3, H3, W3), 0, C3).astype(jnp.int8)
    dice3 = jax.block_until_ready(dice_metric_v2(logits3, labels3))
    ref3 = jax.block_until_ready(_reference(logits3, labels3))
    assert np.allclose(np.asarray(dice3), np.asarray(ref3),
                       rtol=1e-5, atol=1e-6), (dice3, ref3)

    print("KERNEL_OK")
</pallas_src>

<mosaic_0001>
module attributes {stable_mosaic.version = 11 : i64} {
  func.func @_dice_kernel(%arg0: i32, %arg1: i32, %arg2: i32, %arg3: memref<1x4x32x128xf32, #tpu.memory_space<vmem>>, %arg4: memref<1x32x128xi32, #tpu.memory_space<vmem>>, %arg5: memref<1x1x8x128xi32, #tpu.memory_space<vmem>>, %arg6: memref<32x128xi32, #tpu.memory_space<vmem>>) attributes {dimension_semantics = [#tpu.dimension_semantics<parallel>, #tpu.dimension_semantics<parallel>, #tpu.dimension_semantics<arbitrary>], iteration_bounds = array<i64: 2, 1, 1>, scalar_prefetch = 0 : i64, scratch_operands = 1 : i64, tpu.core_type = #tpu.core_type<tc>, window_params = [{transform_indices = @transform_0, window_bounds = array<i64: 1, 4, 32, 128>}, {transform_indices = @transform_1, window_bounds = array<i64: 1, 32, 128>}, {transform_indices = @transform_2, window_bounds = array<i64: 1, 1, 8, 128>}]} {
    %c0_i32 = arith.constant 0 : i32
    %0 = arith.cmpi eq, %arg2, %c0_i32 : i32
    %1 = arith.extui %0 : i1 to i32
    %c0_i32_0 = arith.constant 0 : i32
    %2 = arith.cmpi ne, %1, %c0_i32_0 : i32
    scf.if %2 {
      %c0_i32_23 = arith.constant 0 : i32
      %33 = vector.broadcast %c0_i32_23 : i32 to vector<32x128xi32>
      %c0_24 = arith.constant 0 : index
      %c0_25 = arith.constant 0 : index
      %34 = vector.load %arg6[%c0_24, %c0_25] : memref<32x128xi32, #tpu.memory_space<vmem>>, vector<32x128xi32>
      tpu.vector_store %arg6[%c0_24, %c0_25], %33 {strides = array<i32>} : memref<32x128xi32, #tpu.memory_space<vmem>>, vector<32x128xi32>,
    } else {
    }
    %c0 = arith.constant 0 : index
    %c0_1 = arith.constant 0 : index
    %c0_2 = arith.constant 0 : index
    %c0_3 = arith.constant 0 : index
    %3 = vector.load %arg3[%c0, %c0_1, %c0_2, %c0_3] : memref<1x4x32x128xf32, #tpu.memory_space<vmem>>, vector<1x1x32x128xf32>
    %4 = vector.shape_cast %3 : vector<1x1x32x128xf32> to vector<32x128xf32>
    %c0_i32_4 = arith.constant 0 : i32
    %5 = vector.broadcast %c0_i32_4 : i32 to vector<32x128xi32>
    %c0_5 = arith.constant 0 : index
    %c1 = arith.constant 1 : index
    %c0_6 = arith.constant 0 : index
    %c0_7 = arith.constant 0 : index
    %6 = vector.load %arg3[%c0_5, %c1, %c0_6, %c0_7] : memref<1x4x32x128xf32, #tpu.memory_space<vmem>>, vector<1x1x32x128xf32>
    %7 = vector.shape_cast %6 : vector<1x1x32x128xf32> to vector<32x128xf32>
    %8 = arith.cmpf ogt, %7, %4 : vector<32x128xf32>
    %9 = arith.select %8, %7, %4 : vector<32x128xi1>, vector<32x128xf32>
    %c1_i32 = arith.constant 1 : i32
    %10 = vector.broadcast %c1_i32 : i32 to vector<32x128xi32>
    %11 = arith.select %8, %10, %5 : vector<32x128xi1>, vector<32x128xi32>
    %c0_8 = arith.constant 0 : index
    %c2 = arith.constant 2 : index
    %c0_9 = arith.constant 0 : index
    %c0_10 = arith.constant 0 : index
    %12 = vector.load %arg3[%c0_8, %c2, %c0_9, %c0_10] : memref<1x4x32x128xf32, #tpu.memory_space<vmem>>, vector<1x1x32x128xf32>
    %13 = vector.shape_cast %12 : vector<1x1x32x128xf32> to vector<32x128xf32>
    %14 = arith.cmpf ogt, %13, %9 : vector<32x128xf32>
    %15 = arith.select %14, %13, %9 : vector<32x128xi1>, vector<32x128xf32>
    %c2_i32 = arith.constant 2 : i32
    %16 = vector.broadcast %c2_i32 : i32 to vector<32x128xi32>
    %17 = arith.select %14, %16, %11 : vector<32x128xi1>, vector<32x128xi32>
    %c0_11 = arith.constant 0 : index
    %c3 = arith.constant 3 : index
    %c0_12 = arith.constant 0 : index
    %c0_13 = arith.constant 0 : index
    %18 = vector.load %arg3[%c0_11, %c3, %c0_12, %c0_13] : memref<1x4x32x128xf32, #tpu.memory_space<vmem>>, vector<1x1x32x128xf32>
    %19 = vector.shape_cast %18 : vector<1x1x32x128xf32> to vector<32x128xf32>
    %20 = arith.cmpf ogt, %19, %15 : vector<32x128xf32>
    %c3_i32 = arith.constant 3 : i32
    %21 = vector.broadcast %c3_i32 : i32 to vector<32x128xi32>
    %22 = arith.select %20, %21, %17 : vector<32x128xi1>, vector<32x128xi32>
    %c0_14 = arith.constant 0 : index
    %c0_15 = arith.constant 0 : index
    %c0_16 = arith.constant 0 : index
    %23 = vector.load %arg4[%c0_14, %c0_15, %c0_16] : memref<1x32x128xi32, #tpu.memory_space<vmem>>, vector<1x32x128xi32>
    %24 = vector.shape_cast %23 : vector<1x32x128xi32> to vector<32x128xi32>
    %c0_17 = arith.constant 0 : index
    %c0_18 = arith.constant 0 : index
    %25 = vector.load %arg6[%c0_17, %c0_18] : memref<32x128xi32, #tpu.memory_space<vmem>>, vector<32x128xi32>
    %26 = arith.cmpi eq, %22, %24 : vector<32x128xi32>
    %27 = arith.extui %26 : vector<32x128xi1> to vector<32x128xi32>
    %28 = arith.addi %25, %27 : vector<32x128xi32>
    %c0_19 = arith.constant 0 : index
    %c0_20 = arith.constant 0 : index
    %29 = vector.load %arg6[%c0_19, %c0_20] : memref<32x128xi32, #tpu.memory_space<vmem>>, vector<32x128xi32>
    tpu.vector_store %arg6[%c0_19, %c0_20], %28 {strides = array<i32>} : memref<32x128xi32, #tpu.memory_space<vmem>>, vector<32x128xi32>,
    %c0_i32_21 = arith.constant 0 : i32
    %30 = arith.cmpi eq, %arg2, %c0_i32_21 : i32
    %31 = arith.extui %30 : i1 to i32
    %c0_i32_22 = arith.constant 0 : i32
    %32 = arith.cmpi ne, %31, %c0_i32_22 : i32
    scf.if %32 {
      %c0_23 = arith.constant 0 : index
      %c0_24 = arith.constant 0 : index
      %33 = vector.load %arg6[%c0_23, %c0_24] : memref<32x128xi32, #tpu.memory_space<vmem>>, vector<32x128xi32>
      %34 = vector.shape_cast %33 : vector<32x128xi32> to vector<1x32x128xi32>
      %cst = arith.constant dense<0> : vector<1xi32>
      %35 = vector.multi_reduction <add>, %34, %cst [1, 2] : vector<1x32x128xi32> to vector<1xi32>
      %36 = vector.shape_cast %35 : vector<1xi32> to vector<1x1x1xi32>
      %37 = vector.extract %36[0, 0, 0] : i32 from vector<1x1x1xi32>
      %38 = vector.broadcast %37 : i32 to vector<8x128xi32>
      %c0_25 = arith.constant 0 : index
      %c0_26 = arith.constant 0 : index
      %c0_27 = arith.constant 0 : index
      %c0_28 = arith.constant 0 : index
      %39 = vector.load %arg5[%c0_25, %c0_26, %c0_27, %c0_28] : memref<1x1x8x128xi32, #tpu.memory_space<vmem>>, vector<1x1x8x128xi32>
      %40 = vector.shape_cast %39 : vector<1x1x8x128xi32> to vector<8x128xi32>
      %41 = vector.shape_cast %38 : vector<8x128xi32> to vector<1x1x8x128xi32>
      tpu.vector_store %arg5[%c0_25, %c0_26, %c0_27, %c0_28], %41 {strides = array<i32>} : memref<1x1x8x128xi32, #tpu.memory_space<vmem>>, vector<1x1x8x128xi32>,
    } else {
    }
    return
  }
  func.func @transform_0(%arg0: i32, %arg1: i32, %arg2: i32) -> (i32, i32, i32, i32) {
    %c1_i32 = arith.constant 1 : i32
    %0 = arith.muli %arg1, %c1_i32 : i32
    %1 = arith.addi %0, %arg2 : i32
    %c0_i32 = arith.constant 0 : i32
    %c0_i32_0 = arith.constant 0 : i32
    %c0_i32_1 = arith.constant 0 : i32
    return %arg0, %c0_i32, %1, %c0_i32_0 : i32, i32, i32, i32
  }
  func.func @transform_1(%arg0: i32, %arg1: i32, %arg2: i32) -> (i32, i32, i32) {
    %c1_i32 = arith.constant 1 : i32
    %0 = arith.muli %arg1, %c1_i32 : i32
    %1 = arith.addi %0, %arg2 : i32
    %c0_i32 = arith.constant 0 : i32
    %c0_i32_0 = arith.constant 0 : i32
    return %arg0, %1, %c0_i32 : i32, i32, i32
  }
  func.func @transform_2(%arg0: i32, %arg1: i32, %arg2: i32) -> (i32, i32, i32, i32) {
    %c0_i32 = arith.constant 0 : i32
    %c0_i32_0 = arith.constant 0 : i32
    %c0_i32_1 = arith.constant 0 : i32
    return %arg0, %arg1, %c0_i32, %c0_i32_0 : i32, i32, i32, i32
  }
}

</mosaic_0001>

<llo_original>
// kernel: tpu_custom_call.1
$region0: #{tpu_custom_call.1}
  #allocation0 [shape = 'u32[]', space=smem, size = 0x4, offset = 0x4, fixed_abs, tag = 'smem constant byte address 0x4 - core index']
  #allocation1 [shape = 'u32[144,128]{1,0:T(1,128)}', space=vmem, size = 0x12000, scoped, tag = 'internal scratch']
  #allocation2 [shape = 's32[32,128]{1,0:T(8,128)}', space=vmem, size = 0x4000, scoped, tag = 'scratch operand']
  %s0 = inlined_call_operand.hbm [shape: f32[2,4,32,128], index: 0, kind: input, shape index: {}]
  %s1 = inlined_call_operand.hbm [shape: s32[2,32,128], index: 1, kind: input, shape index: {}]
  %s2 = inlined_call_operand.hbm [shape: s32[2,1,8,128], index: 2, kind: output, shape index: {}]
  %s3 = sld [smem:[#allocation0]]
  $region57: #{tpu_custom_call.1} parent=0
    _
  %s5 = ssub.s32 1, %s3
  %s6 = scalar_select 0, %s5, %s3
  $region1: #{tpu_custom_call.1} parent=0
    #allocation3 [shape = 'u8[131072]{0}', space=vmem, size = 0x20000, scoped, tag = 'input window, operand 0']
    #allocation4 [shape = 's32[2]{0}', space=sflag, size = 0x8, scoped, tag = 'scoped memory for tpu_custom_call.1']
    #allocation5 [shape = 's32[2]{0}', space=sflag, size = 0x8, scoped, tag = 'scoped memory for tpu_custom_call.1']
    #allocation6 [shape = 'u8[32768]{0}', space=vmem, size = 0x8000, scoped, tag = 'input window, operand 1']
    #allocation7 [shape = 's32[2]{0}', space=sflag, size = 0x8, scoped, tag = 'scoped memory for tpu_custom_call.1']
    #allocation8 [shape = 'u8[8192]{0}', space=vmem, size = 0x2000, scoped, tag = 'output window, operand 0']
    %7 = vsyncpa [#allocation4], 0
    %s8 = scalar_lea.sflag [#allocation4], 1
    %9 = vsyncpa %s8, 0
    %10 = vsyncpa [#allocation7], 0
    %s11 = scalar_lea.sflag [#allocation7], 1
    %12 = vsyncpa %s11, 0
    %13 = vsyncpa [#allocation5], 0
    %s14 = scalar_lea.sflag [#allocation5], 1
    %15 = vsyncpa %s14, 0
    loop: start=0, step=1, limit=4
    $region2: #{tpu_custom_call.1} parent=1 // loop_pre_header
      _
    $region3: #{tpu_custom_call.1} parent=1 // loop_header
      %s17 = sphi 0, %s21
      %p18 = scmp.ge.s32.totalorder %s17, 4
      %s24 = sphi 0, %s43
      %s25 = sphi 0, %s39
      %s26 = sphi 0, %s35
      %s27 = sphi 0, %s24
      %s28 = sphi 0, %s25
      %s29 = sphi 0, %s26
      %s30 = sphi 0, %s27
      %s31 = sphi 0, %s28
      %s32 = sphi 0, %s29
      %s50 = sphi 0, %s52
      %s53 = sphi 0, %s50
      %s54 = sphi 0, %s53
      %s70 = sphi 0, %s54
      %s80 = sphi 0, %s82
      %s83 = sphi 0, %s80
      %s84 = sphi 0, %s83
      %s100 = sphi 0, %s84
      %s108 = sphi 0, %s110
      %s111 = sphi 0, %s108
      %s112 = sphi 0, %s111
      %s128 = sphi 0, %s112
    $region4: #{tpu_custom_call.1} parent=1 // loop_header_branch
      %20 = sbr.rel (%p18) target = $region8
    $region5: #{tpu_custom_call.1} parent=1 // loop_body
      %s22 = ssub.s32 %s17, 1
      %s23 = ssub.s32 %s17, 2
      %s33 = sadd.s32 1, %s26
      %p34 = scmp.ge.s32.totalorder %s33, 1
      %s35 = scalar_select %p34, 0, %s33
      %s36 = sadd.s32 1, %s25
      %s37 = scalar_select %p34, %s36, %s25
      %p38 = scmp.ge.s32.totalorder %s37, 1
      %s39 = scalar_select %p38, 0, %s37
      %s40 = sadd.s32 1, %s24
      %s41 = scalar_select %p38, %s40, %s24
      %p42 = scmp.ge.s32.totalorder %s41, 2
      %s43 = scalar_select %p42, 0, %s41
      %s44 = sadd.s32 %s25, %s26
      %s45 = sadd.s32 %s39, %s35
      %s46 = ssub.s32 %s24, %s43
      %s47 = ssub.s32 %s44, %s45
      %s48 = sor.u32 %s46, %s47
      %p49 = scmp.eq.s32.totalorder %s48, 0
      %s51 = sadd.s32 %s50, 1
      %s52 = scalar_select %p49, %s50, %s51
      %p55 = pneg %p49
      %p56 = scmp.eq.s32.totalorder %s17, 1
      %p57 = por %p55, %p56
      %p58 = scmp.ne.s32.totalorder %s50, %s53
      %p59 = scmp.eq.s32.totalorder %s17, 0
      %p60 = por %p58, %p59
      %p61 = scmp.ne.s32.totalorder %s50, %s53
      %p62 = scmp.eq.s32.totalorder %s22, 1
      %p63 = por %p61, %p62
      %p64 = scmp.ne.s32.totalorder %s53, %s54
      %p65 = scmp.eq.s32.totalorder %s22, 0
      %p66 = por %p64, %p65
      %p67 = scmp.ne.s32.totalorder %s53, %s54
      %p68 = scmp.eq.s32.totalorder %s23, 1
      %p69 = por %p67, %p68
      %p71 = scmp.ne.s32.totalorder %s54, %s70
      %p72 = scmp.eq.s32.totalorder %s23, 0
      %p73 = por %p71, %p72
      %s74 = sadd.s32 %s25, %s26
      %s75 = sadd.s32 %s39, %s35
      %s76 = ssub.s32 %s24, %s43
      %s77 = ssub.s32 %s74, %s75
      %s78 = sor.u32 %s76, %s77
      %p79 = scmp.eq.s32.totalorder %s78, 0
      %s81 = sadd.s32 %s80, 1
      %s82 = scalar_select %p79, %s80, %s81
      %p85 = pneg %p79
      %p86 = scmp.eq.s32.totalorder %s17, 1
      %p87 = por %p85, %p86
      %p88 = scmp.ne.s32.totalorder %s80, %s83
      %p89 = scmp.eq.s32.totalorder %s17, 0
      %p90 = por %p88, %p89
      %p91 = scmp.ne.s32.totalorder %s80, %s83
      %p92 = scmp.eq.s32.totalorder %s22, 1
      %p93 = por %p91, %p92
      %p94 = scmp.ne.s32.totalorder %s83, %s84
      %p95 = scmp.eq.s32.totalorder %s22, 0
      %p96 = por %p94, %p95
      %p97 = scmp.ne.s32.totalorder %s83, %s84
      %p98 = scmp.eq.s32.totalorder %s23, 1
      %p99 = por %p97, %p98
      %p101 = scmp.ne.s32.totalorder %s84, %s100
      %p102 = scmp.eq.s32.totalorder %s23, 0
      %p103 = por %p101, %p102
      %s104 = ssub.s32 %s24, %s43
      %s105 = ssub.s32 %s25, %s39
      %s106 = sor.u32 %s104, %s105
      %p107 = scmp.eq.s32.totalorder %s106, 0
      %s109 = sadd.s32 %s108, 1
      %s110 = scalar_select %p107, %s108, %s109
      %p113 = pneg %p107
      %p114 = scmp.eq.s32.totalorder %s17, 1
      %p115 = por %p113, %p114
      %p116 = scmp.ne.s32.totalorder %s108, %s111
      %p117 = scmp.eq.s32.totalorder %s17, 0
      %p118 = por %p116, %p117
      %p119 = scmp.ne.s32.totalorder %s108, %s111
      %p120 = scmp.eq.s32.totalorder %s22, 1
      %p121 = por %p119, %p120
      %p122 = scmp.ne.s32.totalorder %s111, %s112
      %p123 = scmp.eq.s32.totalorder %s22, 0
      %p124 = por %p122, %p123
      %p125 = scmp.ne.s32.totalorder %s111, %s112
      %p126 = scmp.eq.s32.totalorder %s23, 1
      %p127 = por %p125, %p126
      %p129 = scmp.ne.s32.totalorder %s112, %s128
      %p130 = scmp.eq.s32.totalorder %s23, 0
      %p131 = por %p129, %p130
      %p132 = scmp.le.s32.totalorder 1, %s17
      %p133 = scmp.lt.s32.totalorder %s17, 3
      %p134 = pnand %p132, %p133
      %p135 = pneg %p134
      // Predicated region
      $region9: #{tpu_custom_call.1} parent=5 // pred_check
        _
      $region10: #{tpu_custom_call.1} parent=5 // pred_check_branch
        %137 = sbr.rel (%p134) target = $region12
      $region11: #{tpu_custom_call.1} parent=5 // pred_region
        %s138 = ssub.s32 %s17, 1
      $region12: #{tpu_custom_call.1} parent=5 // pred_fallthru
        _
      %p139 = scmp.lt.s32.totalorder %s17, 2
      // Predicated region
      $region13: #{tpu_custom_call.1} parent=5 // pred_check
        %p140 = pneg %p139
      $region14: #{tpu_custom_call.1} parent=5 // pred_check_branch
        %142 = sbr.rel (%p140) target = $region16
      $region15: #{tpu_custom_call.1} parent=5 // pred_region
        // Predicated region
        $region17: #{tpu_custom_call.1} parent=15 // pred_check
          %p143 = pneg %p60
        $region18: #{tpu_custom_call.1} parent=15 // pred_check_branch
          %145 = sbr.rel (%p143) target = $region20
        $region19: #{tpu_custom_call.1} parent=15 // pred_region
          %s146 = sand.u32 %s50, 1
          %s147 = scalar_lea.sflag [#allocation4], %s146
          %s148 = sand.u32 %s50, 1
          %s149 = smul.addr %s148, 128
          %s150 = scalar_lea.vmem [#allocation3], %s149
          %s151 = sadd.s32 %s25, %s26
          %s152 = smul.u32 4, %s151
          %s154 = ssub.s32 2048, 2048
          %155 = vsyncadd %s147, %s154
          %s156 = smul.addr %s24, 16
          %s157 = sadd.s32 %s152, %s156
          %s158 = smul.addr %s157, 128
          %s159 = scalar_lea.hbm %s0, %s158
          %s160 = sshll.u32 %s150, 4
          %s161 = int_to_ptr.vmem [resolvable:$true] %s160
          %166 = dma.hbm_to_vmem [thread:$0]  %s159, 2048, %s161, %s147, 128, 128, 8
        $region20: #{tpu_custom_call.1} parent=15 // pred_fallthru
          _
        // Predicated region
        $region21: #{tpu_custom_call.1} parent=15 // pred_check
          %p167 = pneg %p90
        $region22: #{tpu_custom_call.1} parent=15 // pred_check_branch
          %169 = sbr.rel (%p167) target = $region24
        $region23: #{tpu_custom_call.1} parent=15 // pred_region
          %s170 = sand.u32 %s80, 1
          %s171 = scalar_lea.sflag [#allocation7], %s170
          %s172 = sand.u32 %s80, 1
          %s173 = smul.addr %s172, 32
          %s174 = scalar_lea.vmem [#allocation6], %s173
          %s175 = sadd.s32 %s25, %s26
          %s176 = smul.u32 4, %s175
          %s178 = ssub.s32 512, 512
          %179 = vsyncadd %s171, %s178
          %s180 = smul.addr %s24, 4
          %s181 = sadd.s32 %s176, %s180
          %s182 = smul.addr %s181, 128
          %s183 = scalar_lea.hbm %s1, %s182
          %s184 = sshll.u32 %s174, 4
          %s185 = int_to_ptr.vmem [resolvable:$true] %s184
          %190 = dma.hbm_to_vmem [thread:$0]  %s183, 512, %s185, %s171, 128, 128, 8
        $region24: #{tpu_custom_call.1} parent=15 // pred_fallthru
          _
      $region16: #{tpu_custom_call.1} parent=5 // pred_fallthru
        _
      %p191 = scmp.le.s32.totalorder 1, %s17
      %p192 = scmp.lt.s32.totalorder %s17, 3
      %p193 = pnand %p191, %p192
      %p194 = pneg %p193
      // Predicated region
      $region25: #{tpu_custom_call.1} parent=5 // pred_check
        _
      $region26: #{tpu_custom_call.1} parent=5 // pred_check_branch
        %196 = sbr.rel (%p193) target = $region28
      $region27: #{tpu_custom_call.1} parent=5 // pred_region
        %s197 = ssub.s32 %s17, 1
        %s198 = sand.u32 %s53, 1
        %s199 = scalar_lea.sflag [#allocation4], %s198
        %s200 = sand.u32 %s53, 1
        %s201 = smul.addr %s200, 128
        %s202 = scalar_lea.vmem [#allocation3], %s201
        // Predicated region
        $region29: #{tpu_custom_call.1} parent=27 // pred_check
          %p203 = pneg %p66
        $region30: #{tpu_custom_call.1} parent=27 // pred_check_branch
          %205 = sbr.rel (%p203) target = $region32
        $region31: #{tpu_custom_call.1} parent=27 // pred_region
          %206 = dma.done %s199, 2048
        $region32: #{tpu_custom_call.1} parent=27 // pred_fallthru
          _
        %s207 = sand.u32 %s83, 1
        %s208 = scalar_lea.sflag [#allocation7], %s207
        %s209 = sand.u32 %s83, 1
        %s210 = smul.addr %s209, 32
        %s211 = scalar_lea.vmem [#allocation6], %s210
        // Predicated region
        $region33: #{tpu_custom_call.1} parent=27 // pred_check
          %p212 = pneg %p96
        $region34: #{tpu_custom_call.1} parent=27 // pred_check_branch
          %214 = sbr.rel (%p212) target = $region36
        $region35: #{tpu_custom_call.1} parent=27 // pred_region
          %215 = dma.done %s208, 512
        $region36: #{tpu_custom_call.1} parent=27 // pred_fallthru
          _
        %s216 = sand.u32 %s53, 1
        %s217 = scalar_lea.sflag [#allocation4], %s216
        %s218 = sand.u32 %s53, 1
        %s219 = smul.addr %s218, 128
        %s220 = scalar_lea.vmem [#allocation3], %s219
        %p221 = pneg %p66
        %p222 = pneg %p63
        %s223 = sand.u32 %s83, 1
        %s224 = scalar_lea.sflag [#allocation7], %s223
        %s225 = sand.u32 %s83, 1
        %s226 = smul.addr %s225, 32
        %s227 = scalar_lea.vmem [#allocation6], %s226
        %p228 = pneg %p96
        %p229 = pneg %p93
        %p230 = pneg %p124
        %p231 = pneg %p121
        %s232 = sand.u32 %s111, 1
        %s233 = scalar_lea.sflag [#allocation5], %s232
        %s234 = sand.u32 %s111, 1
        %s235 = smul.addr %s234, 8
        %s236 = scalar_lea.vmem [#allocation8], %s235
        %s237 = sadd.s32 %s28, %s29
        %s238 = smul.u32 4, %s237
        %s239 = sadd.s32 %s28, %s29
        %s240 = smul.u32 4, %s239
        %p241 = scmp.eq.s32.totalorder %s29, 0
        // Predicated region
        $region37: #{tpu_custom_call.1} parent=27 // pred_check
          %p242 = pneg %p241
        $region38: #{tpu_custom_call.1} parent=27 // pred_check_branch
          %244 = sbr.rel (%p242) target = $region40
        $region39: #{tpu_custom_call.1} parent=27 // pred_region
          %245 = vst [vmem:[#allocation2] sm:$0xff] 0
          %246 = vst [vmem:[#allocation2 + $0x8] sm:$0xff] 0
          %247 = vst [vmem:[#allocation2 + $0x10] sm:$0xff] 0
          %248 = vst [vmem:[#allocation2 + $0x18] sm:$0xff] 0
        $region40: #{tpu_custom_call.1} parent=27 // pred_fallthru
          _
        %v249 = vld [vmem:[%s202] sm:$0xff]
        %v250 = vld [vmem:[%s202 + $0x8] sm:$0xff]
        %v251 = vld [vmem:[%s202 + $0x10] sm:$0xff]
        %v252 = vld [vmem:[%s202 + $0x18] sm:$0xff]
        %s253 = scalar_lea.vmem %s202, 32 [#allocation3]
        %v254 = vld [vmem:[%s253] sm:$0xff]
        %v255 = vld [vmem:[%s253 + $0x8] sm:$0xff]
        %v256 = vld [vmem:[%s253 + $0x10] sm:$0xff]
        %v257 = vld [vmem:[%s253 + $0x18] sm:$0xff]
        %vm258 = vcmp.gt.f32.partialorder %v254, %v249
        %vm259 = vcmp.gt.f32.partialorder %v255, %v250
        %vm260 = vcmp.gt.f32.partialorder %v256, %v251
        %vm261 = vcmp.gt.f32.partialorder %v257, %v252
        %v262 = vsel %vm258, %v254, %v249
        %v263 = vsel %vm259, %v255, %v250
        %v264 = vsel %vm260, %v256, %v251
        %v265 = vsel %vm261, %v257, %v252
        %v266 = vsel %vm258, 1, 0
        %v267 = vsel %vm259, 1, 0
        %v268 = vsel %vm260, 1, 0
        %v269 = vsel %vm261, 1, 0
        %s270 = scalar_lea.vmem %s202, 64 [#allocation3]
        %v271 = vld [vmem:[%s270] sm:$0xff]
        %v272 = vld [vmem:[%s270 + $0x8] sm:$0xff]
        %v273 = vld [vmem:[%s270 + $0x10] sm:$0xff]
        %v274 = vld [vmem:[%s270 + $0x18] sm:$0xff]
        %vm275 = vcmp.gt.f32.partialorder %v271, %v262
        %vm276 = vcmp.gt.f32.partialorder %v272, %v263
        %vm277 = vcmp.gt.f32.partialorder %v273, %v264
        %vm278 = vcmp.gt.f32.partialorder %v274, %v265
        %v279 = vsel %vm275, %v271, %v262
        %v280 = vsel %vm276, %v272, %v263
        %v281 = vsel %vm277, %v273, %v264
        %v282 = vsel %vm278, %v274, %v265
        %v283 = vsel %vm275, 2, %v266
        %v284 = vsel %vm276, 2, %v267
        %v285 = vsel %vm277, 2, %v268
        %v286 = vsel %vm278, 2, %v269
        %s287 = scalar_lea.vmem %s202, 96 [#allocation3]
        %v288 = vld [vmem:[%s287] sm:$0xff]
        %v289 = vld [vmem:[%s287 + $0x8] sm:$0xff]
        %v290 = vld [vmem:[%s287 + $0x10] sm:$0xff]
        %v291 = vld [vmem:[%s287 + $0x18] sm:$0xff]
        %vm292 = vcmp.gt.f32.partialorder %v288, %v279
        %vm293 = vcmp.gt.f32.partialorder %v289, %v280
        %vm294 = vcmp.gt.f32.partialorder %v290, %v281
        %vm295 = vcmp.gt.f32.partialorder %v291, %v282
        %v296 = vsel %vm292, 3, %v283
        %v297 = vsel %vm293, 3, %v284
        %v298 = vsel %vm294, 3, %v285
        %v299 = vsel %vm295, 3, %v286
        %v300 = vld [vmem:[%s211] sm:$0xff]
        %v301 = vld [vmem:[%s211 + $0x8] sm:$0xff]
        %v302 = vld [vmem:[%s211 + $0x10] sm:$0xff]
        %v303 = vld [vmem:[%s211 + $0x18] sm:$0xff]
        %v304 = vld [vmem:[#allocation2] sm:$0xff]
        %v305 = vld [vmem:[#allocation2 + $0x8] sm:$0xff]
        %v306 = vld [vmem:[#allocation2 + $0x10] sm:$0xff]
        %v307 = vld [vmem:[#allocation2 + $0x18] sm:$0xff]
        %vm308 = vcmp.eq.s32.totalorder %v296, %v300
        %vm309 = vcmp.eq.s32.totalorder %v297, %v301
        %vm310 = vcmp.eq.s32.totalorder %v298, %v302
        %vm311 = vcmp.eq.s32.totalorder %v299, %v303
        %v312 = vsel %vm308, 1, 0
        %v313 = vsel %vm309, 1, 0
        %v314 = vsel %vm310, 1, 0
        %v315 = vsel %vm311, 1, 0
        %v316 = vadd.s32 %v304, %v312
        %v317 = vadd.s32 %v305, %v313
        %v318 = vadd.s32 %v306, %v314
        %v319 = vadd.s32 %v307, %v315
        %320 = vst [vmem:[#allocation2] sm:$0xff] %v316
        %321 = vst [vmem:[#allocation2 + $0x8] sm:$0xff] %v317
        %322 = vst [vmem:[#allocation2 + $0x10] sm:$0xff] %v318
        %323 = vst [vmem:[#allocation2 + $0x18] sm:$0xff] %v319
        // Predicated region
        $region41: #{tpu_custom_call.1} parent=27 // pred_check
          %p324 = pneg %p241
        $region42: #{tpu_custom_call.1} parent=27 // pred_check_branch
          %326 = sbr.rel (%p324) target = $region44
        $region43: #{tpu_custom_call.1} parent=27 // pred_region
          %v327 = vld [vmem:[#allocation2] sm:$0xff]
          %v328 = vld [vmem:[#allocation2 + $0x8] sm:$0xff]
          %v329 = vld [vmem:[#allocation2 + $0x10] sm:$0xff]
          %v330 = vld [vmem:[#allocation2 + $0x18] sm:$0xff]
          %v331 = vadd.s32 %v327, %v328
          %v332 = vadd.s32 %v329, %v330
          %v333 = vadd.s32 %v331, %v332
          %v334 = vand.u32 %v333, 65535
          %v335 = vshrl.u32 %v333, 16
          %v336 = vcvt.s32.f32 %v334
          %v337 = vcvt.s32.f32 %v335
          %338 = vadd.xlane.f32.xlu0 %v336
          %v339 = vpop.xlane.xlu0 %338
          %340 = vadd.xlane.f32.xlu0 %v337
          %v341 = vpop.xlane.xlu0 %340
          %v342 = vcvt.f32.s32 %v339
          %v343 = vcvt.f32.s32 %v341
          %v344 = vshll.u32 %v343, 16
          %v345 = vadd.s32 %v344, %v342
          %v346 = vrot.slane %v345, 4
          %v347 = vadd.s32 %v345, %v346
          %v348 = vrot.slane %v347, 2
          %v349 = vadd.s32 %v347, %v348
          %v350 = vrot.slane %v349, 1
          %v351 = vadd.s32 %v349, %v350
          %s352 = vtos %v351
          %v353 = vstv %s352
          %354 = vst [vmem:[%s236] sm:$0xff] %v353
        $region44: #{tpu_custom_call.1} parent=27 // pred_fallthru
          _
        %s355 = sand.u32 %s111, 1
        %s356 = scalar_lea.sflag [#allocation5], %s355
        %s357 = sand.u32 %s111, 1
        %s358 = smul.addr %s357, 8
        %s359 = scalar_lea.vmem [#allocation8], %s358
        // Predicated region
        $region45: #{tpu_custom_call.1} parent=27 // pred_check
          %p360 = pneg %p121
        $region46: #{tpu_custom_call.1} parent=27 // pred_check_branch
          %362 = sbr.rel (%p360) target = $region48
        $region47: #{tpu_custom_call.1} parent=27 // pred_region
          %s364 = ssub.s32 128, 128
          %365 = vsyncadd %s356, %s364
          %s366 = sadd.s32 %s28, %s27
          %s367 = smul.addr %s366, 128
          %s368 = scalar_lea.hbm %s2, %s367
          %s370 = sshll.u32 %s359, 4
          %s371 = int_to_ptr.vmem [resolvable:$true] %s370
          %373 = dma.vmem_to_hbm [thread:$0]  %s371, 128, %s368, %s356
        $region48: #{tpu_custom_call.1} parent=27 // pred_fallthru
          _
      $region28: #{tpu_custom_call.1} parent=5 // pred_fallthru
        _
      %p374 = scmp.le.s32.totalorder 2, %s17
      // Predicated region
      $region49: #{tpu_custom_call.1} parent=5 // pred_check
        %p375 = pneg %p374
      $region50: #{tpu_custom_call.1} parent=5 // pred_check_branch
        %377 = sbr.rel (%p375) target = $region52
      $region51: #{tpu_custom_call.1} parent=5 // pred_region
        %s378 = ssub.s32 %s17, 2
        // Predicated region
        $region53: #{tpu_custom_call.1} parent=51 // pred_check
          %p379 = pneg %p127
        $region54: #{tpu_custom_call.1} parent=51 // pred_check_branch
          %381 = sbr.rel (%p379) target = $region56
        $region55: #{tpu_custom_call.1} parent=51 // pred_region
          %s382 = sand.u32 %s112, 1
          %s383 = scalar_lea.sflag [#allocation5], %s382
          %s384 = sand.u32 %s112, 1
          %s385 = smul.addr %s384, 8
          %s386 = scalar_lea.vmem [#allocation8], %s385
          %387 = dma.done %s383, 128
        $region56: #{tpu_custom_call.1} parent=51 // pred_fallthru
          _
      $region52: #{tpu_custom_call.1} parent=5 // pred_fallthru
        _
    $region6: #{tpu_custom_call.1} parent=1 // loop_footer
      %s21 = sadd.s32 1, %s17
    $region7: #{tpu_custom_call.1} parent=1 // loop_footer_branch
      %16 = sbr.rel target = $region3
    $region8: #{tpu_custom_call.1} parent=1 // loop_exit
      _
    %388 = vsyncpa [#allocation4], 1
    %s389 = scalar_lea.sflag [#allocation4], 1
    %390 = vsyncpa %s389, 1
    %391 = vsyncpa [#allocation7], 1
    %s392 = scalar_lea.sflag [#allocation7], 1
    %393 = vsyncpa %s392, 1
    %394 = vsyncpa [#allocation5], 1
    %s395 = scalar_lea.sflag [#allocation5], 1
    %396 = vsyncpa %s395, 1

</llo_original>
